<compile_context>
chip_gen: v6e
topology: v6e:2x2x1
jax: 0.10.0
libtpu: 0.0.40
codegen_flags: <defaults>
</compile_context>

<pallas_src>
import jax
import jax.numpy as jnp
from jax.experimental import pallas as pl
from jax.experimental.pallas import tpu as pltpu

# ----------------------- model config (small, deterministic) -----------------------
H = 8            # horizon (TimeLayer h)
ALPHA = 1.0      # model_alpha (TimeLayer alpha)
NU = 4           # nu
NX = 4           # nx
Q = 8            # q (fixed in module)
NUM_OUT = Q * H  # 64
B = 8            # demo batch

BH = 16                    # branch hidden per horizon step
BRANCH_HID = H * BH        # 128  (block-diag branch hidden width)
XIN_W = 48                 # activation slab: [u_flat(32) | t(1) | x0(4) | pad(11)]
TX_W = 16                  # [t | x0 | pad] width fed to the fused first stage
FUSED_HID = 32 + 16 + 16   # 64   [post_h | trunk_h | root_h]
SLAB_W = 3 * NUM_OUT       # 192  [u_post | t_out | x0_out]

# Row offsets inside the merged bf16 weight slab (all multiples of 16 = bf16 sublane tile).
R_BW1 = 0                        # (32, 128) block-diag branch layer 1
R_BW2 = R_BW1 + H * NU           # 32  -> (128, 64) block-diag branch layer 2
R_W1G = R_BW2 + BRANCH_HID       # 160 -> (64, 64)  gated -> fused hidden
R_W1T = R_W1G + NUM_OUT          # 224 -> (16, 64)  [t|x0|pad] -> fused hidden
R_W2F = R_W1T + TX_W             # 240 -> (64, 192) fused hidden -> [u_post|t_out|x0_out]
W_ROWS = R_W2F + FUSED_HID       # 304


def _fcn_kernel(x_ref, w_ref, c_ref, out_ref):
    f32 = jnp.float32
    bf16 = jnp.bfloat16

    x = x_ref[...]                                   # (TB, 48) f32
    u_flat = x[:, 0:H * NU].astype(bf16)             # (TB, 32) horizon-major flatten of u
    t = x[:, H * NU:H * NU + 1]                      # (TB, 1)  f32 (kept f32 for the gate)
    tx0 = x[:, H * NU:H * NU + TX_W].astype(bf16)    # (TB, 16) = [t | x0 | 0...]

    # packed bf16 weights (static, sublane-aligned slices of the VMEM-resident slab)
    bw1 = w_ref[R_BW1:R_BW1 + H * NU, 0:BRANCH_HID]      # (32, 128)
    bw2 = w_ref[R_BW2:R_BW2 + BRANCH_HID, 0:NUM_OUT]     # (128, 64)
    w1g = w_ref[R_W1G:R_W1G + NUM_OUT, 0:FUSED_HID]      # (64, 64)
    w1t = w_ref[R_W1T:R_W1T + TX_W, 0:FUSED_HID]         # (16, 64)
    w2f = w_ref[R_W2F:R_W2F + FUSED_HID, :]              # (64, 192)

    # f32 biases + gate indices (lane-major rows)
    bb1 = c_ref[0:1, 0:BRANCH_HID]                   # (1, 128)
    bb2 = c_ref[1:2, 0:NUM_OUT]                      # (1, 64)
    b1f = c_ref[2:3, 0:FUSED_HID]                    # (1, 64)
    b2f = c_ref[3:4, :]                              # (1, 192)
    hidx = c_ref[4:5, 0:NUM_OUT]                     # (1, 64) horizon index per output lane

    # ---- BranchNet: all H per-horizon MLPs as two block-diagonal bf16 MXU matmuls ----
    h1 = jnp.maximum(jnp.dot(u_flat, bw1, preferred_element_type=f32) + bb1, 0.0)   # (TB,128)
    branch = jnp.dot(h1.astype(bf16), bw2, preferred_element_type=f32) + bb2        # (TB, 64)

    # ---- TimeLayer: sigmoid(alpha*(t - i)) for every horizon, one vectorized EUP op ----
    gate = jax.nn.sigmoid(ALPHA * (t - hidx))                                        # (TB, 64)
    gated = branch * gate

    # ---- Fused PostBranch/Trunk/Root first stage, concat-free (two dots, one accumulator) ----
    hf = jnp.maximum(
        jnp.dot(gated.astype(bf16), w1g, preferred_element_type=f32)
        + jnp.dot(tx0, w1t, preferred_element_type=f32) + b1f, 0.0)                  # (TB, 64)
    s = jnp.dot(hf.astype(bf16), w2f, preferred_element_type=f32) + b2f              # (TB,192)

    u_post = s[:, 0:NUM_OUT]
    t_out = s[:, NUM_OUT:2 * NUM_OUT]
    x0_out = s[:, 2 * NUM_OUT:]

    # Cross-lane reduce on the (idle) XLU; (TB,1) masked store is negligible at this size.
    out_ref[...] = jnp.sum(x0_out * u_post * t_out, axis=1, keepdims=True)


def pack_params(params):
    """Host-side, one-time packing of the 16 raw parameter arrays into 2 slabs
    (bf16 merged weights + f32 biases/constants)."""
    (bw1, bb1, bw2, bb2, pw1, pb1, pw2, pb2,
     tw1, tb1, tw2, tb2, rw1, rb1, rw2, rb2) = params

    W = jnp.zeros((W_ROWS, SLAB_W), jnp.float32)
    # block-diagonal branch weights (exact zeros off the diagonal blocks)
    for i in range(H):
        W = W.at[R_BW1 + i * NU:R_BW1 + (i + 1) * NU, i * BH:(i + 1) * BH].set(bw1[i])
        W = W.at[R_BW2 + i * BH:R_BW2 + (i + 1) * BH, i * Q:(i + 1) * Q].set(bw2[i])
    # fused first stage, split into a gated-block and a [t|x0] block (no in-kernel concat)
    W = W.at[R_W1G:R_W1G + NUM_OUT, 0:32].set(pw1)                 # gated -> post hidden
    W = W.at[R_W1T:R_W1T + 1, 32:48].set(tw1)                      # t     -> trunk hidden
    W = W.at[R_W1T + 1:R_W1T + 1 + NX, 48:64].set(rw1)             # x0    -> root hidden
    # fused second stage
    W = W.at[R_W2F + 0:R_W2F + 32, 0:NUM_OUT].set(pw2)
    W = W.at[R_W2F + 32:R_W2F + 48, NUM_OUT:2 * NUM_OUT].set(tw2)
    W = W.at[R_W2F + 48:R_W2F + 64, 2 * NUM_OUT:].set(rw2)
    w_all = W.astype(jnp.bfloat16)                                 # (304, 192) bf16

    # biases + TimeLayer horizon index per output lane, all f32, lane-major rows
    consts = jnp.zeros((8, SLAB_W), jnp.float32)
    consts = consts.at[0, 0:BRANCH_HID].set(bb1.reshape(-1))
    consts = consts.at[1, 0:NUM_OUT].set(bb2.reshape(-1))
    consts = consts.at[2, 0:FUSED_HID].set(jnp.concatenate([pb1, tb1, rb1]))
    consts = consts.at[3, :].set(jnp.concatenate([pb2, tb2, rb2]))
    consts = consts.at[4, 0:NUM_OUT].set((jnp.arange(NUM_OUT) // Q).astype(jnp.float32))
    return w_all, consts


@jax.jit
def fcn_model_sequence(u, x0, t, packed):
    w_all, consts = packed
    bsz = u.shape[0]

    # single activation slab: [u_flat | t | x0 | pad] (f32; cast to bf16 inside the kernel)
    pad_w = XIN_W - (H * NU + 1 + NX)
    x_in = jnp.concatenate(
        [u.reshape(bsz, H * NU).astype(jnp.float32),
         t.astype(jnp.float32),
         x0.astype(jnp.float32),
         jnp.zeros((bsz, pad_w), jnp.float32)],
        axis=1)                                                    # (bsz, 48)

    # batch tiling:
    #  - small batch: one tile, padded to a multiple of 8 rows (full-sublane accesses)
    #  - large batch: 512-1024-row tiles, capped so the "parallel" grid has >= 2 steps
    #    (engages the 2nd TensorCore on v7x); VMEM stays tiny even at tb=1024.
    if bsz <= 128:
        b_pad = ((bsz + 7) // 8) * 8
        tb = b_pad
    else:
        n128 = pl.cdiv(bsz, 128)
        tb = min(1024, max(128, (n128 // 2) * 128))
        b_pad = pl.cdiv(bsz, tb) * tb
    if b_pad != bsz:
        x_in = jnp.pad(x_in, ((0, b_pad - bsz), (0, 0)))

    flops = 2 * b_pad * (H * NU * BRANCH_HID + BRANCH_HID * NUM_OUT
                         + NUM_OUT * FUSED_HID + TX_W * FUSED_HID
                         + FUSED_HID * SLAB_W)
    bytes_accessed = (4 * b_pad * XIN_W + 2 * w_all.size + 4 * consts.size + 4 * b_pad)

    # NOTE: pipeline_mode=pl.Buffered(1) on the two constant-index parameter inputs was
    # considered (perf review) but skipped: after slab merging + bf16 they total ~118 KiB,
    # so the extra buffer is negligible, and the constant index_map already avoids re-DMA.
    out = pl.pallas_call(
        _fcn_kernel,
        out_shape=jax.ShapeDtypeStruct((b_pad, 1), jnp.float32),
        grid=(b_pad // tb,),
        in_specs=[
            pl.BlockSpec((tb, XIN_W), lambda i: (i, 0)),
            pl.BlockSpec(w_all.shape, lambda i: (0, 0)),
            pl.BlockSpec(consts.shape, lambda i: (0, 0)),
        ],
        out_specs=pl.BlockSpec((tb, 1), lambda i: (i, 0)),
        compiler_params=pltpu.CompilerParams(dimension_semantics=("parallel",)),
        cost_estimate=pl.CostEstimate(flops=flops,
                                      transcendentals=b_pad * NUM_OUT,
                                      bytes_accessed=bytes_accessed),
    )(x_in, w_all, consts)
    return out[:bsz]


def init_params(key):
    """Deterministic small-scale init. Weights stored (in, out)."""
    ks = jax.random.split(key, 16)
    s = 0.1
    return (
        # BranchNet: stacked over horizon
        s * jax.random.normal(ks[0], (H, NU, BH), jnp.float32),    # bw1
        s * jax.random.normal(ks[1], (H, BH), jnp.float32),        # bb1
        s * jax.random.normal(ks[2], (H, BH, Q), jnp.float32),     # bw2
        s * jax.random.normal(ks[3], (H, Q), jnp.float32),         # bb2
        # PostBranchNet
        s * jax.random.normal(ks[4], (Q * H, 32), jnp.float32),    # pw1
        s * jax.random.normal(ks[5], (32,), jnp.float32),          # pb1
        s * jax.random.normal(ks[6], (32, NUM_OUT), jnp.float32),  # pw2
        s * jax.random.normal(ks[7], (NUM_OUT,), jnp.float32),     # pb2
        # TrunkNet
        s * jax.random.normal(ks[8], (1, 16), jnp.float32),        # tw1
        s * jax.random.normal(ks[9], (16,), jnp.float32),          # tb1
        s * jax.random.normal(ks[10], (16, NUM_OUT), jnp.float32), # tw2
        s * jax.random.normal(ks[11], (NUM_OUT,), jnp.float32),    # tb2
        # RootNet
        s * jax.random.normal(ks[12], (NX, 16), jnp.float32),      # rw1
        s * jax.random.normal(ks[13], (16,), jnp.float32),         # rb1
        s * jax.random.normal(ks[14], (16, NUM_OUT), jnp.float32), # rw2
        s * jax.random.normal(ks[15], (NUM_OUT,), jnp.float32),    # rb2
    )


def reference_forward(u, x0, t, params):
    """Pure-JAX f32 reference mirroring the PyTorch forward (loop form, unpacked params)."""
    (bw1, bb1, bw2, bb2, pw1, pb1, pw2, pb2,
     tw1, tb1, tw2, tb2, rw1, rb1, rw2, rb2) = params
    chunks = []
    for i in range(H):
        ui = u[:, i, :]
        h1 = jnp.maximum(ui @ bw1[i] + bb1[i], 0.0)
        bi = h1 @ bw2[i] + bb2[i]
        gate = jax.nn.sigmoid(ALPHA * (t - float(i)))   # TimeLayer
        chunks.append(bi * gate)
    gated = jnp.concatenate(chunks, axis=1)
    p = jnp.maximum(gated @ pw1 + pb1, 0.0)
    u_post = p @ pw2 + pb2
    tr = jnp.maximum(t @ tw1 + tb1, 0.0)
    t_out = tr @ tw2 + tb2
    r = jnp.maximum(x0 @ rw1 + rb1, 0.0)
    x0_out = r @ rw2 + rb2
    out = x0_out * u_post * t_out
    return jnp.sum(out, axis=1).reshape((-1, 1))


if __name__ == "__main__":
    key = jax.random.PRNGKey(0)
    k_u, k_x0, k_t, k_p = jax.random.split(key, 4)

    u = jax.random.normal(k_u, (B, H, NU), jnp.float32)
    x0 = jax.random.normal(k_x0, (B, NX), jnp.float32)
    t = jax.random.uniform(k_t, (B, 1), jnp.float32, minval=0.0, maxval=float(H))
    params = init_params(k_p)
    packed = pack_params(params)      # one-time host-side packing

    # --- small-batch path (single tile) ---
    out = jax.block_until_ready(fcn_model_sequence(u, x0, t, packed))
    assert out.shape == (B, 1), out.shape
    ref = reference_forward(u, x0, t, params)
    # atol widened 1e-3 -> 5e-3 to account for bf16 weight slabs (per the perf review);
    # the f32-weight version of this kernel matched at atol=1e-3.
    if not jnp.allclose(out, ref, rtol=1e-2, atol=5e-3):
        raise AssertionError(f"mismatch: kernel={out.ravel()} ref={ref.ravel()}")

    # --- large-batch path (exercises 1024-row tiles and the >=2-step parallel grid) ---
    B2 = 2048
    kb = jax.random.split(jax.random.PRNGKey(1), 3)
    u2 = jax.random.normal(kb[0], (B2, H, NU), jnp.float32)
    x02 = jax.random.normal(kb[1], (B2, NX), jnp.float32)
    t2 = jax.random.uniform(kb[2], (B2, 1), jnp.float32, minval=0.0, maxval=float(H))
    out2 = jax.block_until_ready(fcn_model_sequence(u2, x02, t2, packed))
    assert out2.shape == (B2, 1), out2.shape
    ref2 = reference_forward(u2, x02, t2, params)
    if not jnp.allclose(out2, ref2, rtol=1e-2, atol=5e-3):
        d = float(jnp.max(jnp.abs(out2 - ref2)))
        raise AssertionError(f"large-batch mismatch: max abs diff {d}")

    print("KERNEL_OK")
</pallas_src>

<mosaic_0001>
module attributes {stable_mosaic.version = 11 : i64} {
  func.func @_fcn_kernel(%arg0: i32, %arg1: memref<8x48xf32, #tpu.memory_space<vmem>>, %arg2: memref<304x192xbf16, #tpu.memory_space<vmem>>, %arg3: memref<8x192xf32, #tpu.memory_space<vmem>>, %arg4: memref<8x1xf32, #tpu.memory_space<vmem>>) attributes {dimension_semantics = [#tpu.dimension_semantics<parallel>], iteration_bounds = array<i64: 1>, scalar_prefetch = 0 : i64, scratch_operands = 0 : i64, tpu.core_type = #tpu.core_type<tc>, window_params = [{transform_indices = @transform_0, window_bounds = array<i64: 8, 48>}, {pipeline_mode = #tpu.pipeline_mode<synchronous>, transform_indices = @transform_1, window_bounds = array<i64: 304, 192>}, {pipeline_mode = #tpu.pipeline_mode<synchronous>, transform_indices = @transform_2, window_bounds = array<i64: 8, 192>}, {transform_indices = @transform_3, window_bounds = array<i64: 8, 1>}]} {
    %c0 = arith.constant 0 : index
    %c0_0 = arith.constant 0 : index
    %0 = vector.load %arg1[%c0, %c0_0] : memref<8x48xf32, #tpu.memory_space<vmem>>, vector<8x48xf32>
    %1 = vector.extract_strided_slice %0 {offsets = [0, 0], sizes = [8, 32], strides = [1, 1]} : vector<8x48xf32> to vector<8x32xf32>
    %2 = arith.truncf %1 : vector<8x32xf32> to vector<8x32xbf16>
    %3 = vector.extract_strided_slice %0 {offsets = [0, 32], sizes = [8, 1], strides = [1, 1]} : vector<8x48xf32> to vector<8x1xf32>
    %4 = vector.extract_strided_slice %0 {offsets = [0, 32], sizes = [8, 16], strides = [1, 1]} : vector<8x48xf32> to vector<8x16xf32>
    %5 = arith.truncf %4 : vector<8x16xf32> to vector<8x16xbf16>
    %c0_1 = arith.constant 0 : index
    %c0_2 = arith.constant 0 : index
    %6 = vector.load %arg2[%c0_1, %c0_2] : memref<304x192xbf16, #tpu.memory_space<vmem>>, vector<32x128xbf16>
    %c32 = arith.constant 32 : index
    %c0_3 = arith.constant 0 : index
    %7 = vector.load %arg2[%c32, %c0_3] : memref<304x192xbf16, #tpu.memory_space<vmem>>, vector<128x64xbf16>
    %c160 = arith.constant 160 : index
    %c0_4 = arith.constant 0 : index
    %8 = vector.load %arg2[%c160, %c0_4] : memref<304x192xbf16, #tpu.memory_space<vmem>>, vector<64x64xbf16>
    %c224 = arith.constant 224 : index
    %c0_5 = arith.constant 0 : index
    %9 = vector.load %arg2[%c224, %c0_5] : memref<304x192xbf16, #tpu.memory_space<vmem>>, vector<16x64xbf16>
    %c240 = arith.constant 240 : index
    %c0_6 = arith.constant 0 : index
    %10 = vector.load %arg2[%c240, %c0_6] : memref<304x192xbf16, #tpu.memory_space<vmem>>, vector<64x192xbf16>
    %c0_7 = arith.constant 0 : index
    %c0_8 = arith.constant 0 : index
    %11 = vector.load %arg3[%c0_7, %c0_8] : memref<8x192xf32, #tpu.memory_space<vmem>>, vector<1x128xf32>
    %c1 = arith.constant 1 : index
    %c0_9 = arith.constant 0 : index
    %12 = vector.load %arg3[%c1, %c0_9] : memref<8x192xf32, #tpu.memory_space<vmem>>, vector<1x64xf32>
    %c2 = arith.constant 2 : index
    %c0_10 = arith.constant 0 : index
    %13 = vector.load %arg3[%c2, %c0_10] : memref<8x192xf32, #tpu.memory_space<vmem>>, vector<1x64xf32>
    %c3 = arith.constant 3 : index
    %c0_11 = arith.constant 0 : index
    %14 = vector.load %arg3[%c3, %c0_11] : memref<8x192xf32, #tpu.memory_space<vmem>>, vector<1x192xf32>
    %c4 = arith.constant 4 : index
    %c0_12 = arith.constant 0 : index
    %15 = vector.load %arg3[%c4, %c0_12] : memref<8x192xf32, #tpu.memory_space<vmem>>, vector<1x64xf32>
    %cst = arith.constant dense<0.000000e+00> : vector<8x128xf32>
    %16 = tpu.matmul %2, %6, %cst {dimension_numbers = #tpu.dot_dimension_numbers<[1], [0], [0], [1], [0, 0, 1, 1], [], []>} : vector<8x32xbf16>, vector<32x128xbf16>, vector<8x128xf32> -> vector<8x128xf32>
    %17 = vector.broadcast %11 : vector<1x128xf32> to vector<8x128xf32>
    %18 = arith.addf %16, %17 : vector<8x128xf32>
    %cst_13 = arith.constant 0.000000e+00 : f32
    %19 = vector.broadcast %cst_13 : f32 to vector<8x128xf32>
    %20 = arith.maximumf %18, %19 : vector<8x128xf32>
    %21 = arith.truncf %20 : vector<8x128xf32> to vector<8x128xbf16>
    %cst_14 = arith.constant dense<0.000000e+00> : vector<8x64xf32>
    %22 = tpu.matmul %21, %7, %cst_14 {dimension_numbers = #tpu.dot_dimension_numbers<[1], [0], [0], [1], [0, 0, 1, 1], [], []>} : vector<8x128xbf16>, vector<128x64xbf16>, vector<8x64xf32> -> vector<8x64xf32>
    %23 = vector.broadcast %12 : vector<1x64xf32> to vector<8x64xf32>
    %24 = arith.addf %22, %23 : vector<8x64xf32>
    %25 = vector.broadcast %3 : vector<8x1xf32> to vector<8x64xf32>
    %26 = vector.broadcast %15 : vector<1x64xf32> to vector<8x64xf32>
    %27 = arith.subf %25, %26 : vector<8x64xf32>
    %cst_15 = arith.constant 1.000000e+00 : f32
    %28 = vector.broadcast %cst_15 : f32 to vector<8x64xf32>
    %29 = arith.mulf %28, %27 : vector<8x64xf32>
    %30 = arith.negf %29 : vector<8x64xf32>
    %31 = math.exp %30 : vector<8x64xf32>
    %cst_16 = arith.constant 1.000000e+00 : f32
    %32 = vector.broadcast %cst_16 : f32 to vector<8x64xf32>
    %33 = arith.addf %32, %31 : vector<8x64xf32>
    %34 = arith.divf %32, %33 : vector<8x64xf32>
    %35 = arith.mulf %24, %34 : vector<8x64xf32>
    %36 = arith.truncf %35 : vector<8x64xf32> to vector<8x64xbf16>
    %cst_17 = arith.constant dense<0.000000e+00> : vector<8x64xf32>
    %37 = tpu.matmul %36, %8, %cst_17 {dimension_numbers = #tpu.dot_dimension_numbers<[1], [0], [0], [1], [0, 0, 1, 1], [], []>} : vector<8x64xbf16>, vector<64x64xbf16>, vector<8x64xf32> -> vector<8x64xf32>
    %cst_18 = arith.constant dense<0.000000e+00> : vector<8x64xf32>
    %38 = tpu.matmul %5, %9, %cst_18 {dimension_numbers = #tpu.dot_dimension_numbers<[1], [0], [0], [1], [0, 0, 1, 1], [], []>} : vector<8x16xbf16>, vector<16x64xbf16>, vector<8x64xf32> -> vector<8x64xf32>
    %39 = arith.addf %37, %38 : vector<8x64xf32>
    %40 = vector.broadcast %13 : vector<1x64xf32> to vector<8x64xf32>
    %41 = arith.addf %39, %40 : vector<8x64xf32>
    %cst_19 = arith.constant 0.000000e+00 : f32
    %42 = vector.broadcast %cst_19 : f32 to vector<8x64xf32>
    %43 = arith.maximumf %41, %42 : vector<8x64xf32>
    %44 = arith.truncf %43 : vector<8x64xf32> to vector<8x64xbf16>
    %cst_20 = arith.constant dense<0.000000e+00> : vector<8x192xf32>
    %45 = tpu.matmul %44, %10, %cst_20 {dimension_numbers = #tpu.dot_dimension_numbers<[1], [0], [0], [1], [0, 0, 1, 1], [], []>} : vector<8x64xbf16>, vector<64x192xbf16>, vector<8x192xf32> -> vector<8x192xf32>
    %46 = vector.broadcast %14 : vector<1x192xf32> to vector<8x192xf32>
    %47 = arith.addf %45, %46 : vector<8x192xf32>
    %48 = vector.extract_strided_slice %47 {offsets = [0, 0], sizes = [8, 64], strides = [1, 1]} : vector<8x192xf32> to vector<8x64xf32>
    %49 = vector.extract_strided_slice %47 {offsets = [0, 64], sizes = [8, 64], strides = [1, 1]} : vector<8x192xf32> to vector<8x64xf32>
    %50 = vector.extract_strided_slice %47 {offsets = [0, 128], sizes = [8, 64], strides = [1, 1]} : vector<8x192xf32> to vector<8x64xf32>
    %51 = arith.mulf %50, %48 : vector<8x64xf32>
    %52 = arith.mulf %51, %49 : vector<8x64xf32>
    %cst_21 = arith.constant dense<0.000000e+00> : vector<8xf32>
    %53 = vector.multi_reduction <add>, %52, %cst_21 [1] : vector<8x64xf32> to vector<8xf32>
    %54 = vector.shape_cast %53 : vector<8xf32> to vector<8x1xf32>
    %c0_22 = arith.constant 0 : index
    %c0_23 = arith.constant 0 : index
    %55 = vector.load %arg4[%c0_22, %c0_23] : memref<8x1xf32, #tpu.memory_space<vmem>>, vector<8x1xf32>
    tpu.vector_store %arg4[%c0_22, %c0_23], %54 {strides = array<i32>} : memref<8x1xf32, #tpu.memory_space<vmem>>, vector<8x1xf32>,
    return
  }
  func.func @transform_0(%arg0: i32) -> (i32, i32) {
    %c0_i32 = arith.constant 0 : i32
    %c0_i32_0 = arith.constant 0 : i32
    return %arg0, %c0_i32 : i32, i32
  }
  func.func @transform_1(%arg0: i32) -> (i32, i32) {
    %c0_i32 = arith.constant 0 : i32
    %c0_i32_0 = arith.constant 0 : i32
    %c0_i32_1 = arith.constant 0 : i32
    return %c0_i32, %c0_i32_0 : i32, i32
  }
  func.func @transform_2(%arg0: i32) -> (i32, i32) {
    %c0_i32 = arith.constant 0 : i32
    %c0_i32_0 = arith.constant 0 : i32
    %c0_i32_1 = arith.constant 0 : i32
    return %c0_i32, %c0_i32_0 : i32, i32
  }
  func.func @transform_3(%arg0: i32) -> (i32, i32) {
    %c0_i32 = arith.constant 0 : i32
    %c0_i32_0 = arith.constant 0 : i32
    return %arg0, %c0_i32 : i32, i32
  }
}

</mosaic_0001>

<llo_original>
// kernel: fcn_model_sequence.1
$region0: #{fcn_model_sequence.1}
  #allocation0 [shape = 'u32[]', space=smem, size = 0x4, offset = 0x4, fixed_abs, tag = 'smem constant byte address 0x4 - core index']
  #allocation1 [shape = 'u32[144,128]{1,0:T(1,128)}', space=vmem, size = 0x12000, scoped, tag = 'internal scratch']
  %s0 = inlined_call_operand.vmem [shape: f32[8,48], index: 0, kind: input, shape index: {}]
  %s1 = inlined_call_operand.vmem [shape: bf16[304,192], index: 1, kind: input, shape index: {}]
  %s2 = inlined_call_operand.vmem [shape: f32[8,192], index: 2, kind: input, shape index: {}]
  %s3 = inlined_call_operand.vmem [shape: f32[8,1], index: 3, kind: output, shape index: {}]
  %s4 = sld [smem:[#allocation0]]
  $region22: #{fcn_model_sequence.1} parent=0
    _
  %s6 = ssub.s32 1, %s4
  %s7 = scalar_select 0, %s6, %s4
  // Predicated region
  $region2: #{fcn_model_sequence.1} parent=0 // pred_check
    _
  $region3: #{fcn_model_sequence.1} parent=0 // pred_check_branch
    %9 = sbr.rel (0) target = $region5
  $region4: #{fcn_model_sequence.1} parent=0 // pred_region
    _
  $region5: #{fcn_model_sequence.1} parent=0 // pred_fallthru
    _
  // Predicated region
  $region6: #{fcn_model_sequence.1} parent=0 // pred_check
    _
  $region7: #{fcn_model_sequence.1} parent=0 // pred_check_branch
    %11 = sbr.rel (0) target = $region9
  $region8: #{fcn_model_sequence.1} parent=0 // pred_region
    _
  $region9: #{fcn_model_sequence.1} parent=0 // pred_fallthru
    _
  // Predicated region
  $region10: #{fcn_model_sequence.1} parent=0 // pred_check
    _
  $region11: #{fcn_model_sequence.1} parent=0 // pred_check_branch
    %13 = sbr.rel (0) target = $region13
  $region12: #{fcn_model_sequence.1} parent=0 // pred_region
    _
  $region13: #{fcn_model_sequence.1} parent=0 // pred_fallthru
    _
  %v15 = vld [vmem:[%s0] sm:$0xff]
  %v16 = vpack.c.bf16 %v15, %v15
  %v17 = vld [vmem:[%s1] sm:$0xf]
  %v18 = vld [vmem:[%s1 + $0x8] sm:$0xf]
  %v19 = vld [vmem:[%s1 + $0x10] sm:$0xf]
  %v20 = vld [vmem:[%s1 + $0x18] sm:$0xf]
  %v21 = vld [vmem:[%s1 + $0x20] sm:$0xf]
  %v22 = vld [vmem:[%s1 + $0x28] sm:$0xf]
  %v23 = vld [vmem:[%s1 + $0x30] sm:$0xf]
  %v24 = vld [vmem:[%s1 + $0x38] sm:$0xf]
  %v25 = vld [vmem:[%s1 + $0x40] sm:$0xf]
  %v26 = vld [vmem:[%s1 + $0x48] sm:$0xf]
  %v27 = vld [vmem:[%s1 + $0x50] sm:$0xf]
  %v28 = vld [vmem:[%s1 + $0x58] sm:$0xf]
  %v29 = vld [vmem:[%s1 + $0x60] sm:$0xf]
  %v30 = vld [vmem:[%s1 + $0x68] sm:$0xf]
  %v31 = vld [vmem:[%s1 + $0x70] sm:$0xf]
  %v32 = vld [vmem:[%s1 + $0x78] sm:$0xf]
  %v33 = vld [vmem:[%s1 + $0x80] sm:$0xf]
  %v34 = vld [vmem:[%s1 + $0x88] sm:$0xf]
  %v35 = vld [vmem:[%s1 + $0x90] sm:$0xf]
  %v36 = vld [vmem:[%s1 + $0x98] sm:$0xf]
  %v37 = vld [vmem:[%s1 + $0xa0] sm:$0xf]
  %v38 = vld [vmem:[%s1 + $0xa8] sm:$0xf]
  %v39 = vld [vmem:[%s1 + $0xb0] sm:$0xf]
  %v40 = vld [vmem:[%s1 + $0xb8] sm:$0xf]
  %v41 = vld [vmem:[%s1 + $0xc0] sm:$0xf]
  %v42 = vld [vmem:[%s1 + $0xc8] sm:$0xf]
  %v43 = vld [vmem:[%s1 + $0xd0] sm:$0xf]
  %v44 = vld [vmem:[%s1 + $0xd8] sm:$0xf]
  %v45 = vld [vmem:[%s1 + $0xe0] sm:$0xf]
  %v46 = vld [vmem:[%s1 + $0xe8] sm:$0xf]
  %v47 = vld [vmem:[%s1 + $0xf0] sm:$0xff]
  %v48 = vld [vmem:[%s1 + $0xf8] sm:$0xff]
  %v49 = vld [vmem:[%s1 + $0x100] sm:$0xff]
  %v50 = vld [vmem:[%s1 + $0x108] sm:$0xff]
  %v51 = vld [vmem:[%s1 + $0x110] sm:$0xff]
  %v52 = vld [vmem:[%s1 + $0x118] sm:$0xff]
  %v53 = vld [vmem:[%s1 + $0x120] sm:$0xff]
  %v54 = vld [vmem:[%s1 + $0x128] sm:$0xff]
  %v55 = vld [vmem:[%s2] ss:$0 sm:$0xff]
  %v56 = vld [vmem:[%s2 + $0x1] ss:$0 sm:$0xff]
  %v57 = vld [vmem:[%s2 + $0x2] ss:$0 sm:$0xff]
  %s58 = scalar_lea.vmem %s2, 3
  %v59 = vld [vmem:[%s58] ss:$8 sm:$0x3]
  %v60 = vld [vmem:[%s2 + $0x4] ss:$0 sm:$0xff]
  %v65 = vunpack.c.l.b16 %v17
  %v66 = vunpack.c.l.b16 %v18
  %v67 = vunpack.c.l.b16 %v19
  %v68 = vunpack.c.l.b16 %v20
  %v69 = vpack.c.b16 %v66, %v65
  %v70 = vpack.c.b16 %v68, %v67
  %vm73 = vcmask 261120
  %v75 = vsel %vm73, %v16, 0
  %77 = vmatprep.subr.bf16.mxu0 0
  %78 = vmatpush1.bf16.msra.mxu0 0
  %79 = vmatprep.subr.bf16.mxu0 0
  %80 = vmatpush1.bf16.msra.mxu0 0
  %81 = vmatprep.subr.bf16.mxu0 0
  %82 = vmatpush1.bf16.msra.mxu0 0
  %83 = vmatprep.subr.bf16.mxu0 0
  %84 = vmatpush1.bf16.msra.mxu0 0
  %85 = vmatprep.subr.bf16.mxu0 0
  %86 = vmatpush1.bf16.msra.mxu0 0
  %87 = vmatprep.subr.bf16.mxu0 0
  %88 = vmatpush1.bf16.msra.mxu0 0
  %89 = vmatprep.subr.bf16.mxu0 0
  %90 = vmatpush1.bf16.msra.mxu0 %v70
  %91 = vmatprep.subr.bf16.mxu0 0
  %92 = vmatpush1.bf16.msra.mxu0 %v69
  %93 = vmatprep.subr.bf16.mxu0 0
  %94 = vmatpush2.bf16.msra.mxu0 0
  %95 = vmatprep.subr.bf16.mxu0 0
  %96 = vmatpush2.bf16.msra.mxu0 0
  %97 = vmatprep.subr.bf16.mxu0 0
  %98 = vmatpush2.bf16.msra.mxu0 0
  %99 = vmatprep.subr.bf16.mxu0 0
  %100 = vmatpush2.bf16.msra.mxu0 0
  %101 = vmatprep.subr.bf16.mxu0 0
  %102 = vmatpush2.bf16.msra.mxu0 0
  %103 = vmatprep.subr.bf16.mxu0 0
  %104 = vmatpush2.bf16.msra.mxu0 0
  %105 = vmatprep.subr.bf16.mxu0 0
  %106 = vmatpush2.bf16.msra.mxu0 0
  %107 = vmatprep.subr.bf16.mxu0 0
  %108 = vmatpush2.bf16.msra.mxu0 0
  %109 = vmatprep.mubr.bf16.mxu0 0
  %110 = vmatmul.mubr.bf16.gmra.mxu0 %v75
  %v111 = vpop.f32.mrf.mxu0
  %v112 = vadd.f32 %v55, %v111
  %v113 = vpop.f32.mrf.mxu0
  %v114 = vpop.f32.mrf.mxu0
  %v115 = vpop.f32.mrf.mxu0
  %116 = vdwg.mxu0
  %v117 = vmax.f32 %v112, 0.0
  %v118 = vpack.c.bf16 %v117, %v117
  %v135 = vunpack.c.l.b16 %v21
  %v136 = vunpack.c.l.b16 %v22
  %v137 = vunpack.c.l.b16 %v23
  %v138 = vunpack.c.l.b16 %v24
  %v139 = vunpack.c.l.b16 %v25
  %v140 = vunpack.c.l.b16 %v26
  %v141 = vunpack.c.l.b16 %v27
  %v142 = vunpack.c.l.b16 %v28
  %v143 = vunpack.c.l.b16 %v29
  %v144 = vunpack.c.l.b16 %v30
  %v145 = vunpack.c.l.b16 %v31
  %v146 = vunpack.c.l.b16 %v32
  %v147 = vunpack.c.l.b16 %v33
  %v148 = vunpack.c.l.b16 %v34
  %v149 = vunpack.c.l.b16 %v35
  %v150 = vunpack.c.l.b16 %v36
  %v151 = vpack.c.b16 %v136, %v135
  %v152 = vpack.c.b16 %v138, %v137
  %v153 = vpack.c.b16 %v140, %v139
  %v154 = vpack.c.b16 %v142, %v141
  %v155 = vpack.c.b16 %v144, %v143
  %v156 = vpack.c.b16 %v146, %v145
  %v157 = vpack.c.b16 %v148, %v147
  %v158 = vpack.c.b16 %v150, %v149
  %167 = vmatprep.subr.bf16.mxu0 0
  %168 = vmatpush1.bf16.msra.mxu0 %v158
  %169 = vmatprep.subr.bf16.mxu0 0
  %170 = vmatpush1.bf16.msra.mxu0 %v157
  %171 = vmatprep.subr.bf16.mxu0 0
  %172 = vmatpush1.bf16.msra.mxu0 %v156
  %173 = vmatprep.subr.bf16.mxu0 0
  %174 = vmatpush1.bf16.msra.mxu0 %v155
  %175 = vmatprep.subr.bf16.mxu0 0
  %176 = vmatpush1.bf16.msra.mxu0 %v154
  %177 = vmatprep.subr.bf16.mxu0 0
  %178 = vmatpush1.bf16.msra.mxu0 %v153
  %179 = vmatprep.subr.bf16.mxu0 0
  %180 = vmatpush1.bf16.msra.mxu0 %v152
  %181 = vmatprep.subr.bf16.mxu0 0
  %182 = vmatpush1.bf16.msra.mxu0 %v151
  %183 = vmatprep.subr.bf16.mxu0 0
  %184 = vmatpush2.bf16.msra.mxu0 0
  %185 = vmatprep.subr.bf16.mxu0 0
  %186 = vmatpush2.bf16.msra.mxu0 0
  %187 = vmatprep.subr.bf16.mxu0 0
  %188 = vmatpush2.bf16.msra.mxu0 0
  %189 = vmatprep.subr.bf16.mxu0 0
  %190 = vmatpush2.bf16.msra.mxu0 0
  %191 = vmatprep.subr.bf16.mxu0 0
  %192 = vmatpush2.bf16.msra.mxu0 0
  %193 = vmatprep.subr.bf16.mxu0 0
  %194 = vmatpush2.bf16.msra.mxu0 0
  %195 = vmatprep.subr.bf16.mxu0 0
  %196 = vmatpush2.bf16.msra.mxu0 0
  %197 = vmatprep.subr.bf16.mxu0 0
  %198 = vmatpush2.bf16.msra.mxu0 0
  %199 = vmatprep.mubr.bf16.mxu0 0
  %200 = vmatmul.mubr.bf16.gmra.mxu0 %v118
  %v201 = vpop.f32.mrf.mxu0
  %v202 = vadd.f32 %v56, %v201
  %v203 = vpop.f32.mrf.mxu0
  %v204 = vpop.f32.mrf.mxu0
  %v205 = vpop.f32.mrf.mxu0
  %206 = vdwg.mxu0
  %208 = vset.pattern.permute.xlu0 32
  %209 = vperm.xlu0 %208, %v15
  %v210 = vpop.permute.xlu0 %209
  %v212 = vsub.f32 %v210, %v60
  %v213 = vxor.u32 %v212, 2147483648
  %v214 = vmul.f32 %v213, 1.442695
  %v215 = vpow.pop %v214
  %v216 = vadd.f32 %v215, 1.0
  %v217 = vrcp.pop %v216
  %v218 = vmul.f32 1.0, %v217
  %v219 = vmul.f32 %v202, %v218
  %v220 = vpack.c.bf16 %v219, %v219
  %222 = vrot.lane.b32.xlu0 %v16, 96
  %v223 = vpop.permute.xlu0 %222
  %v226 = vunpack.c.l.b16 %v45
  %v227 = vunpack.c.l.b16 %v46
  %v228 = vpack.c.b16 %v227, %v226
  %vm230 = vcmask 130048
  %v232 = vsel %vm230, %v223, 0
  %234 = vmatprep.subr.bf16.mxu0 0
  %235 = vmatpush1.bf16.msra.mxu0 0
  %236 = vmatprep.subr.bf16.mxu0 0
  %237 = vmatpush1.bf16.msra.mxu0 0
  %238 = vmatprep.subr.bf16.mxu0 0
  %239 = vmatpush1.bf16.msra.mxu0 0
  %240 = vmatprep.subr.bf16.mxu0 0
  %241 = vmatpush1.bf16.msra.mxu0 0
  %242 = vmatprep.subr.bf16.mxu0 0
  %243 = vmatpush1.bf16.msra.mxu0 0
  %244 = vmatprep.subr.bf16.mxu0 0
  %245 = vmatpush1.bf16.msra.mxu0 0
  %246 = vmatprep.subr.bf16.mxu0 0
  %247 = vmatpush1.bf16.msra.mxu0 0
  %248 = vmatprep.subr.bf16.mxu0 0
  %249 = vmatpush1.bf16.msra.mxu0 %v228
  %250 = vmatprep.subr.bf16.mxu0 0
  %251 = vmatpush2.bf16.msra.mxu0 0
  %252 = vmatprep.subr.bf16.mxu0 0
  %253 = vmatpush2.bf16.msra.mxu0 0
  %254 = vmatprep.subr.bf16.mxu0 0
  %255 = vmatpush2.bf16.msra.mxu0 0
  %256 = vmatprep.subr.bf16.mxu0 0
  %257 = vmatpush2.bf16.msra.mxu0 0
  %258 = vmatprep.subr.bf16.mxu0 0
  %259 = vmatpush2.bf16.msra.mxu0 0
  %260 = vmatprep.subr.bf16.mxu0 0
  %261 = vmatpush2.bf16.msra.mxu0 0
  %262 = vmatprep.subr.bf16.mxu0 0
  %263 = vmatpush2.bf16.msra.mxu0 0
  %264 = vmatprep.subr.bf16.mxu0 0
  %265 = vmatpush2.bf16.msra.mxu0 0
  %266 = vmatprep.mubr.bf16.mxu0 0
  %267 = vmatmul.mubr.bf16.gmra.mxu0 %v232
  %v268 = vpop.f32.mrf.mxu0
  %v269 = vadd.f32 0.0, %v268
  %v270 = vpop.f32.mrf.mxu0
  %v271 = vpop.f32.mrf.mxu0
  %v272 = vpop.f32.mrf.mxu0
  %273 = vdwg.mxu0
  %v282 = vunpack.c.l.b16 %v37
  %v283 = vunpack.c.l.b16 %v38
  %v284 = vunpack.c.l.b16 %v39
  %v285 = vunpack.c.l.b16 %v40
  %v286 = vunpack.c.l.b16 %v41
  %v287 = vunpack.c.l.b16 %v42
  %v288 = vunpack.c.l.b16 %v43
  %v289 = vunpack.c.l.b16 %v44
  %v290 = vpack.c.b16 %v283, %v282
  %v291 = vpack.c.b16 %v285, %v284
  %v292 = vpack.c.b16 %v287, %v286
  %v293 = vpack.c.b16 %v289, %v288
  %vm298 = vcmask 523264
  %v300 = vsel %vm298, %v220, 0
  %302 = vmatprep.subr.bf16.mxu0 0
  %303 = vmatpush1.bf16.msra.mxu0 0
  %304 = vmatprep.subr.bf16.mxu0 0
  %305 = vmatpush1.bf16.msra.mxu0 0
  %306 = vmatprep.subr.bf16.mxu0 0
  %307 = vmatpush1.bf16.msra.mxu0 0
  %308 = vmatprep.subr.bf16.mxu0 0
  %309 = vmatpush1.bf16.msra.mxu0 0
  %310 = vmatprep.subr.bf16.mxu0 0
  %311 = vmatpush1.bf16.msra.mxu0 %v293
  %312 = vmatprep.subr.bf16.mxu0 0
  %313 = vmatpush1.bf16.msra.mxu0 %v292
  %314 = vmatprep.subr.bf16.mxu0 0
  %315 = vmatpush1.bf16.msra.mxu0 %v291
  %316 = vmatprep.subr.bf16.mxu0 0
  %317 = vmatpush1.bf16.msra.mxu0 %v290
  %318 = vmatprep.subr.bf16.mxu0 0
  %319 = vmatpush2.bf16.msra.mxu0 0
  %320 = vmatprep.subr.bf16.mxu0 0
  %321 = vmatpush2.bf16.msra.mxu0 0
  %322 = vmatprep.subr.bf16.mxu0 0
  %323 = vmatpush2.bf16.msra.mxu0 0
  %324 = vmatprep.subr.bf16.mxu0 0
  %325 = vmatpush2.bf16.msra.mxu0 0
  %326 = vmatprep.subr.bf16.mxu0 0
  %327 = vmatpush2.bf16.msra.mxu0 0
  %328 = vmatprep.subr.bf16.mxu0 0
  %329 = vmatpush2.bf16.msra.mxu0 0
  %330 = vmatprep.subr.bf16.mxu0 0
  %331 = vmatpush2.bf16.msra.mxu0 0
  %332 = vmatprep.subr.bf16.mxu0 0
  %333 = vmatpush2.bf16.msra.mxu0 0
  %334 = vmatprep.mubr.bf16.mxu0 0
  %335 = vmatmul.mubr.bf16.gmra.mxu0 %v300
  %v336 = vpop.f32.mrf.mxu0
  %v337 = vadd.f32 %v269, %v336
  %v338 = vpop.f32.mrf.mxu0
  %v339 = vpop.f32.mrf.mxu0
  %v340 = vpop.f32.mrf.mxu0
  %341 = vdwg.mxu0
  %v342 = vadd.f32 %v337, %v57
  %v343 = vmax.f32 %v342, 0.0
  %v344 = vpack.c.bf16 %v343, %v343
  %v346 = vlaneseq
  %v347 = vshrl.u32 %v346, 7
  %v348 = vsub.s32 0, %v347
  %v349 = vrot.slane %v59, %v348
  %v350 = vlaneseq
  %v351 = vshrl.u32 %v350, 7
  %v352 = vsub.s32 1, %v351
  %v353 = vrot.slane %v59, %v352
  %v364 = vunpack.c.l.b16 %v47
  %v365 = vunpack.c.h.b16 %v47
  %v366 = vunpack.c.l.b16 %v48
  %v367 = vunpack.c.h.b16 %v48
  %v368 = vunpack.c.l.b16 %v49
  %v369 = vunpack.c.h.b16 %v49
  %v370 = vunpack.c.l.b16 %v50
  %v371 = vunpack.c.h.b16 %v50
  %v372 = vunpack.c.l.b16 %v51
  %v373 = vunpack.c.h.b16 %v51
  %v374 = vunpack.c.l.b16 %v52
  %v375 = vunpack.c.h.b16 %v52
  %v376 = vunpack.c.l.b16 %v53
  %v377 = vunpack.c.h.b16 %v53
  %v378 = vunpack.c.l.b16 %v54
  %v379 = vunpack.c.h.b16 %v54
  %v380 = vpack.c.b16 %v366, %v364
  %v381 = vpack.c.b16 %v367, %v365
  %v382 = vpack.c.b16 %v370, %v368
  %v383 = vpack.c.b16 %v371, %v369
  %v384 = vpack.c.b16 %v374, %v372
  %v385 = vpack.c.b16 %v375, %v373
  %v386 = vpack.c.b16 %v378, %v376
  %v387 = vpack.c.b16 %v379, %v377
  %v397 = vsel %vm298, %v344, 0
  %399 = vmatprep.subr.bf16.mxu0 0
  %400 = vmatpush1.bf16.msra.mxu0 0
  %401 = vmatprep.subr.bf16.mxu0 0
  %402 = vmatpush1.bf16.msra.mxu0 0
  %403 = vmatprep.subr.bf16.mxu0 0
  %404 = vmatpush1.bf16.msra.mxu0 0
  %405 = vmatprep.subr.bf16.mxu0 0
  %406 = vmatpush1.bf16.msra.mxu0 0
  %407 = vmatprep.subr.bf16.mxu0 %v387
  %408 = vmatpush1.bf16.msra.mxu0 %v386
  %409 = vmatprep.subr.bf16.mxu0 %v385
  %410 = vmatpush1.bf16.msra.mxu0 %v384
  %411 = vmatprep.subr.bf16.mxu0 %v383
  %412 = vmatpush1.bf16.msra.mxu0 %v382
  %413 = vmatprep.subr.bf16.mxu0 %v381
  %414 = vmatpush1.bf16.msra.mxu0 %v380
  %415 = vmatprep.subr.bf16.mxu0 0
  %416 = vmatpush2.bf16.msra.mxu0 0
  %417 = vmatprep.subr.bf16.mxu0 0
  %418 = vmatpush2.bf16.msra.mxu0 0
  %419 = vmatprep.subr.bf16.mxu0 0
  %420 = vmatpush2.bf16.msra.mxu0 0
  %421 = vmatprep.subr.bf16.mxu0 0
  %422 = vmatpush2.bf16.msra.mxu0 0
  %423 = vmatprep.subr.bf16.mxu0 0
  %424 = vmatpush2.bf16.msra.mxu0 0
  %425 = vmatprep.subr.bf16.mxu0 0
  %426 = vmatpush2.bf16.msra.mxu0 0
  %427 = vmatprep.subr.bf16.mxu0 0
  %428 = vmatpush2.bf16.msra.mxu0 0
  %429 = vmatprep.subr.bf16.mxu0 0
  %430 = vmatpush2.bf16.msra.mxu0 0
  %431 = vmatprep.mubr.bf16.mxu0 0
  %432 = vmatmul.mubr.bf16.gmra.mxu0 %v397
  %v433 = vpop.f32.mrf.mxu0
  %v434 = vadd.f32 %v349, %v433
  %v435 = vpop.f32.mrf.mxu0
  %v436 = vadd.f32 %v353, %v435
  %v437 = vpop.f32.mrf.mxu0
  %v438 = vpop.f32.mrf.mxu0
  %439 = vdwg.mxu0
  %v440 = vmul.f32 %v436, %v434
  %442 = vrot.lane.b32.xlu0 %v434, 64
  %v443 = vpop.permute.xlu0 %442
  %v445 = vmul.f32 %v440, %v443
  %v446 = vsel %vm298, %v445, 0.0
  %447 = vadd.xlane.f32.xlu0 %v446
  %v448 = vpop.xlane.xlu0 %447
  %vm449 = vcmask 7168
  %450 = vst.msk [vmem:[%s3] sm:$0xff] %vm449, %v448
  // Predicated region
  $region14: #{fcn_model_sequence.1} parent=0 // pred_check
    _
  $region15: #{fcn_model_sequence.1} parent=0 // pred_check_branch
    %452 = sbr.rel (0) target = $region17
  $region16: #{fcn_model_sequence.1} parent=0 // pred_region
    _
  $region17: #{fcn_model_sequence.1} parent=0 // pred_fallthru
    _
  // Predicated region
  $region18: #{fcn_model_sequence.1} parent=0 // pred_check
    _
  $region19: #{fcn_model_sequence.1} parent=0 // pred_check_branch
    %454 = sbr.rel (0) target = $region21
  $region20: #{fcn_model_sequence.1} parent=0 // pred_region
    _
  $region21: #{fcn_model_sequence.1} parent=0 // pred_fallthru
    _

</llo_original>
